<compile_context>
chip_gen: v7x
topology: tpu7x:2x2x1
jax: 0.10.0
libtpu: 0.0.40
codegen_flags: <defaults>
</compile_context>

<pallas_src>
import numpy as np
import jax
import jax.numpy as jnp
from jax import lax
from jax.experimental import pallas as pl
from jax.experimental.pallas import tpu as pltpu


_LN_EPS = 1e-5  # torch.nn.functional.layer_norm default


def _round_up(x: int, m: int) -> int:
    return ((x + m - 1) // m) * m


# ----------------------------------------------------------------------------
# Kernel: fused residual + (optional) LayerNorm over the last dim (no affine)
# ----------------------------------------------------------------------------
def _make_residual_kernel(normalize: str):
    def kernel(before_ref, after_ref, o_ref):
        if normalize == "none":
            # Pure residual add: native dtype, no f32 round-trip.
            o_ref[...] = before_ref[...] + after_ref[...]
            return

        before = before_ref[...].astype(jnp.float32)      # (tile, D)
        after = after_ref[...].astype(jnp.float32)        # (tile, D)

        x = after if normalize == "pre" else before + after
        # Two-pass centered statistics (numerically safer than E[x^2]-mu^2).
        mu = jnp.mean(x, axis=-1, keepdims=True)
        xc = x - mu
        var = jnp.mean(xc * xc, axis=-1, keepdims=True)
        ln = xc * lax.rsqrt(var + _LN_EPS)                # F.layer_norm, no affine

        out = before + ln if normalize == "pre" else ln
        o_ref[...] = out.astype(o_ref.dtype)

    return kernel


# ----------------------------------------------------------------------------
# Tile selection: bytes-based, sublane-aligned, >= 2 grid steps when possible
# ----------------------------------------------------------------------------
def _choose_tile_rows(rows: int, cols: int, itemsize: int,
                      target_block_bytes: int, sublane: int) -> int:
    row_bytes = max(1, cols * itemsize)
    cand = target_block_bytes // row_bytes
    if cand >= rows:
        # Whole slab fits in one block; split in two so the single "parallel"
        # axis can still shard across v7x's two TensorCores.
        if rows >= 2 * sublane:
            t = _round_up((rows + 1) // 2, sublane)
            if t < rows:
                return t
        return rows  # block == full dim is always a legal block shape
    t = max(sublane, (cand // sublane) * sublane)  # round DOWN: stay in budget
    return rows if t >= rows else t


# ----------------------------------------------------------------------------
# Wrapper: flatten, tile rows, pallas_call with ragged last block, reshape back
# ----------------------------------------------------------------------------
def residual_pallas(before, after, normalize: str = "pre",
                    *, target_block_bytes: int = 4 << 20):
    assert before.shape == after.shape, "before/after must have the same shape"
    assert normalize in ("pre", "post", "none")

    orig_shape = before.shape
    dtype = before.dtype
    itemsize = np.dtype(dtype).itemsize
    # Native sublane packing: 8 rows (32-bit), 16 (bf16/f16), 32 (int8/fp8).
    sublane = max(8, 32 // max(1, itemsize))

    D = orig_shape[-1] if len(orig_shape) else 1
    R = int(np.prod(orig_shape[:-1])) if len(orig_shape) > 1 else 1

    if normalize == "none":
        # No per-row reduction -> layout is free. Repack lane-dense (last dim a
        # large multiple of 128) when the element count allows it, no padding.
        total = R * D
        if total % 512 == 0:
            rows, cols = total // 512, 512
        elif total % 128 == 0:
            rows, cols = total // 128, 128
        else:
            rows, cols = R, D
    else:
        # LayerNorm reduces over the last dim: keep D on lanes, full width.
        # TODO(synk): for D < 128 stores are lane-masked; pack 128//D rows per
        # lane-row only if profiling shows the store path exposed vs HBM DMA.
        rows, cols = R, D

    b2 = before.reshape(rows, cols)
    a2 = after.reshape(rows, cols)

    tile = _choose_tile_rows(rows, cols, itemsize, target_block_bytes, sublane)
    grid = pl.cdiv(rows, tile)  # ragged last block: OOB rows masked on store

    # Pipeline footprint: 3 refs x 2 buffers x one block, plus headroom for f32
    # temporaries / compiler scratch. Capped to fit v7x's 64 MiB VMEM per TC.
    block_bytes = tile * cols * itemsize
    vmem_limit = int(min(48 << 20, max(32 << 20, 6 * block_bytes + (16 << 20))))

    out = pl.pallas_call(
        _make_residual_kernel(normalize),
        out_shape=jax.ShapeDtypeStruct((rows, cols), dtype),
        grid=(grid,),
        in_specs=[pl.BlockSpec((tile, cols), lambda i: (i, 0)),
                  pl.BlockSpec((tile, cols), lambda i: (i, 0))],
        out_specs=pl.BlockSpec((tile, cols), lambda i: (i, 0)),
        compiler_params=pltpu.CompilerParams(
            dimension_semantics=("parallel",),
            vmem_limit_bytes=vmem_limit,
        ),
    )(b2, a2)

    return out.reshape(orig_shape)


# ----------------------------------------------------------------------------
# Pure-JAX reference for validation
# ----------------------------------------------------------------------------
def _layer_norm_ref(x, eps=_LN_EPS):
    mu = x.mean(-1, keepdims=True)
    var = ((x - mu) ** 2).mean(-1, keepdims=True)
    return (x - mu) / jnp.sqrt(var + eps)


def residual_ref(before, after, normalize: str = "pre"):
    if normalize == "pre":
        return before + _layer_norm_ref(after)
    if normalize == "post":
        return _layer_norm_ref(before + after)
    return before + after


if __name__ == "__main__":
    key = jax.random.PRNGKey(0)
    k1, k2, k3, k4 = jax.random.split(key, 4)

    # Small shape consistent with the module's usage: (batch, seq, hidden).
    B, N, D = 2, 8, 32
    before = jax.random.normal(k1, (B, N, D), jnp.float32)
    after = jax.random.normal(k2, (B, N, D), jnp.float32)
    for mode in ("pre", "post", "none"):
        out = jax.block_until_ready(residual_pallas(before, after, mode))
        ref = residual_ref(before, after, mode)
        np.testing.assert_allclose(np.asarray(out), np.asarray(ref),
                                   rtol=2e-5, atol=2e-5)

    # Larger case: multiple grid steps + ragged last row-block (900 rows),
    # and the lane-dense repack path for 'none' (57600 elems -> (450, 128)).
    B2, N2, D2 = 3, 300, 64
    before2 = jax.random.normal(k3, (B2, N2, D2), jnp.float32)
    after2 = jax.random.normal(k4, (B2, N2, D2), jnp.float32)
    for mode in ("pre", "post", "none"):
        out2 = jax.block_until_ready(residual_pallas(before2, after2, mode))
        ref2 = residual_ref(before2, after2, mode)
        np.testing.assert_allclose(np.asarray(out2), np.asarray(ref2),
                                   rtol=2e-5, atol=2e-5)

    print("KERNEL_OK")
</pallas_src>

<mosaic_0001>
module attributes {stable_mosaic.version = 11 : i64} {
  func.func @kernel(%arg0: i32, %arg1: memref<8x32xf32, #tpu.memory_space<vmem>>, %arg2: memref<8x32xf32, #tpu.memory_space<vmem>>, %arg3: memref<8x32xf32, #tpu.memory_space<vmem>>) attributes {dimension_semantics = [#tpu.dimension_semantics<parallel>], iteration_bounds = array<i64: 2>, scalar_prefetch = 0 : i64, scratch_operands = 0 : i64, tpu.core_type = #tpu.core_type<tc>, window_params = [{transform_indices = @transform_0, window_bounds = array<i64: 8, 32>}, {transform_indices = @transform_1, window_bounds = array<i64: 8, 32>}, {transform_indices = @transform_2, window_bounds = array<i64: 8, 32>}]} {
    %c0 = arith.constant 0 : index
    %c0_0 = arith.constant 0 : index
    %0 = vector.load %arg1[%c0, %c0_0] : memref<8x32xf32, #tpu.memory_space<vmem>>, vector<8x32xf32>
    %c0_1 = arith.constant 0 : index
    %c0_2 = arith.constant 0 : index
    %1 = vector.load %arg2[%c0_1, %c0_2] : memref<8x32xf32, #tpu.memory_space<vmem>>, vector<8x32xf32>
    %cst = arith.constant dense<0.000000e+00> : vector<8xf32>
    %2 = vector.multi_reduction <add>, %1, %cst [1] : vector<8x32xf32> to vector<8xf32>
    %3 = vector.shape_cast %2 : vector<8xf32> to vector<8x1xf32>
    %cst_3 = arith.constant 3.200000e+01 : f32
    %4 = vector.broadcast %cst_3 : f32 to vector<8x1xf32>
    %5 = arith.divf %3, %4 : vector<8x1xf32>
    %6 = vector.broadcast %5 : vector<8x1xf32> to vector<8x32xf32>
    %7 = arith.subf %1, %6 : vector<8x32xf32>
    %8 = arith.mulf %7, %7 : vector<8x32xf32>
    %cst_4 = arith.constant dense<0.000000e+00> : vector<8xf32>
    %9 = vector.multi_reduction <add>, %8, %cst_4 [1] : vector<8x32xf32> to vector<8xf32>
    %10 = vector.shape_cast %9 : vector<8xf32> to vector<8x1xf32>
    %cst_5 = arith.constant 3.200000e+01 : f32
    %11 = vector.broadcast %cst_5 : f32 to vector<8x1xf32>
    %12 = arith.divf %10, %11 : vector<8x1xf32>
    %cst_6 = arith.constant 9.99999974E-6 : f32
    %13 = vector.broadcast %cst_6 : f32 to vector<8x1xf32>
    %14 = arith.addf %12, %13 : vector<8x1xf32>
    %15 = math.rsqrt %14 : vector<8x1xf32>
    %16 = vector.broadcast %15 : vector<8x1xf32> to vector<8x32xf32>
    %17 = arith.mulf %7, %16 : vector<8x32xf32>
    %18 = arith.addf %0, %17 : vector<8x32xf32>
    %c0_7 = arith.constant 0 : index
    %c0_8 = arith.constant 0 : index
    %19 = vector.load %arg3[%c0_7, %c0_8] : memref<8x32xf32, #tpu.memory_space<vmem>>, vector<8x32xf32>
    tpu.vector_store %arg3[%c0_7, %c0_8], %18 {strides = array<i32>} : memref<8x32xf32, #tpu.memory_space<vmem>>, vector<8x32xf32>,
    return
  }
  func.func @transform_0(%arg0: i32) -> (i32, i32) {
    %c0_i32 = arith.constant 0 : i32
    %c0_i32_0 = arith.constant 0 : i32
    return %arg0, %c0_i32 : i32, i32
  }
  func.func @transform_1(%arg0: i32) -> (i32, i32) {
    %c0_i32 = arith.constant 0 : i32
    %c0_i32_0 = arith.constant 0 : i32
    return %arg0, %c0_i32 : i32, i32
  }
  func.func @transform_2(%arg0: i32) -> (i32, i32) {
    %c0_i32 = arith.constant 0 : i32
    %c0_i32_0 = arith.constant 0 : i32
    return %arg0, %c0_i32 : i32, i32
  }
}

</mosaic_0001>

<llo_original>
// kernel: tpu_custom_call.1
$region0: #{tpu_custom_call.1}
  #allocation0 [shape = 'u32[]', space=smem, size = 0x4, offset = 0x4, fixed_abs, tag = 'smem constant byte address 0x4 - core index']
  #allocation1 [shape = 'u32[144,128]{1,0:T(1,128)}', space=vmem, size = 0x12000, scoped, tag = 'internal scratch']
  %s0 = inlined_call_operand.hbm [shape: f32[16,32], index: 0, kind: input, shape index: {}]
  %s1 = inlined_call_operand.hbm [shape: f32[16,32], index: 1, kind: input, shape index: {}]
  %s2 = inlined_call_operand.hbm [shape: f32[16,32], index: 2, kind: output, shape index: {}]
  %s3 = sld [smem:[#allocation0]]
  $region49: #{tpu_custom_call.1} parent=0
    _
  %s5 = ssub.s32 1, %s3
  %s6 = scalar_select 0, %s5, %s3
  $region1: #{tpu_custom_call.1} parent=0
    #allocation2 [shape = 'u8[8192]{0}', space=vmem, size = 0x2000, scoped, tag = 'input window, operand 0']
    #allocation3 [shape = 's32[2]{0}', space=sflag, size = 0x8, scoped, tag = 'scoped memory for tpu_custom_call.1']
    #allocation4 [shape = 's32[2]{0}', space=sflag, size = 0x8, scoped, tag = 'scoped memory for tpu_custom_call.1']
    #allocation5 [shape = 'u8[8192]{0}', space=vmem, size = 0x2000, scoped, tag = 'input window, operand 1']
    #allocation6 [shape = 's32[2]{0}', space=sflag, size = 0x8, scoped, tag = 'scoped memory for tpu_custom_call.1']
    #allocation7 [shape = 'u8[8192]{0}', space=vmem, size = 0x2000, scoped, tag = 'output window, operand 0']
    %7 = vsyncpa [#allocation3], 0
    %s8 = scalar_lea.sflag [#allocation3], 1
    %9 = vsyncpa %s8, 0
    %10 = vsyncpa [#allocation6], 0
    %s11 = scalar_lea.sflag [#allocation6], 1
    %12 = vsyncpa %s11, 0
    %13 = vsyncpa [#allocation4], 0
    %s14 = scalar_lea.sflag [#allocation4], 1
    %15 = vsyncpa %s14, 0
    loop: start=0, step=1, limit=4
    $region2: #{tpu_custom_call.1} parent=1 // loop_pre_header
      _
    $region3: #{tpu_custom_call.1} parent=1 // loop_header
      %s17 = sphi 0, %s21
      %p18 = scmp.ge.s32.totalorder %s17, 4
      %s27 = sphi 0, %s29
      %s30 = sphi 0, %s27
      %s31 = sphi 0, %s30
      %s47 = sphi 0, %s31
      %s53 = sphi 0, %s55
      %s56 = sphi 0, %s53
      %s57 = sphi 0, %s56
      %s73 = sphi 0, %s57
      %s79 = sphi 0, %s81
      %s82 = sphi 0, %s79
      %s83 = sphi 0, %s82
      %s99 = sphi 0, %s83
    $region4: #{tpu_custom_call.1} parent=1 // loop_header_branch
      %20 = sbr.rel (%p18) target = $region8
    $region5: #{tpu_custom_call.1} parent=1 // loop_body
      %s22 = ssub.s32 %s17, 1
      %s23 = ssub.s32 %s17, 2
      %s24 = sadd.s32 %s17, 1
      %s25 = ssub.s32 %s17, %s24
      %p26 = scmp.eq.s32.totalorder %s25, 0
      %s28 = sadd.s32 %s27, 1
      %s29 = scalar_select %p26, %s27, %s28
      %p32 = pneg %p26
      %p33 = scmp.eq.s32.totalorder %s17, 1
      %p34 = por %p32, %p33
      %p35 = scmp.ne.s32.totalorder %s27, %s30
      %p36 = scmp.eq.s32.totalorder %s17, 0
      %p37 = por %p35, %p36
      %p38 = scmp.ne.s32.totalorder %s27, %s30
      %p39 = scmp.eq.s32.totalorder %s22, 1
      %p40 = por %p38, %p39
      %p41 = scmp.ne.s32.totalorder %s30, %s31
      %p42 = scmp.eq.s32.totalorder %s22, 0
      %p43 = por %p41, %p42
      %p44 = scmp.ne.s32.totalorder %s30, %s31
      %p45 = scmp.eq.s32.totalorder %s23, 1
      %p46 = por %p44, %p45
      %p48 = scmp.ne.s32.totalorder %s31, %s47
      %p49 = scmp.eq.s32.totalorder %s23, 0
      %p50 = por %p48, %p49
      %s51 = ssub.s32 %s17, %s24
      %p52 = scmp.eq.s32.totalorder %s51, 0
      %s54 = sadd.s32 %s53, 1
      %s55 = scalar_select %p52, %s53, %s54
      %p58 = pneg %p52
      %p59 = scmp.eq.s32.totalorder %s17, 1
      %p60 = por %p58, %p59
      %p61 = scmp.ne.s32.totalorder %s53, %s56
      %p62 = scmp.eq.s32.totalorder %s17, 0
      %p63 = por %p61, %p62
      %p64 = scmp.ne.s32.totalorder %s53, %s56
      %p65 = scmp.eq.s32.totalorder %s22, 1
      %p66 = por %p64, %p65
      %p67 = scmp.ne.s32.totalorder %s56, %s57
      %p68 = scmp.eq.s32.totalorder %s22, 0
      %p69 = por %p67, %p68
      %p70 = scmp.ne.s32.totalorder %s56, %s57
      %p71 = scmp.eq.s32.totalorder %s23, 1
      %p72 = por %p70, %p71
      %p74 = scmp.ne.s32.totalorder %s57, %s73
      %p75 = scmp.eq.s32.totalorder %s23, 0
      %p76 = por %p74, %p75
      %s77 = ssub.s32 %s17, %s24
      %p78 = scmp.eq.s32.totalorder %s77, 0
      %s80 = sadd.s32 %s79, 1
      %s81 = scalar_select %p78, %s79, %s80
      %p84 = pneg %p78
      %p85 = scmp.eq.s32.totalorder %s17, 1
      %p86 = por %p84, %p85
      %p87 = scmp.ne.s32.totalorder %s79, %s82
      %p88 = scmp.eq.s32.totalorder %s17, 0
      %p89 = por %p87, %p88
      %p90 = scmp.ne.s32.totalorder %s79, %s82
      %p91 = scmp.eq.s32.totalorder %s22, 1
      %p92 = por %p90, %p91
      %p93 = scmp.ne.s32.totalorder %s82, %s83
      %p94 = scmp.eq.s32.totalorder %s22, 0
      %p95 = por %p93, %p94
      %p96 = scmp.ne.s32.totalorder %s82, %s83
      %p97 = scmp.eq.s32.totalorder %s23, 1
      %p98 = por %p96, %p97
      %p100 = scmp.ne.s32.totalorder %s83, %s99
      %p101 = scmp.eq.s32.totalorder %s23, 0
      %p102 = por %p100, %p101
      %p103 = scmp.le.s32.totalorder 1, %s17
      %p104 = scmp.lt.s32.totalorder %s17, 3
      %p105 = pnand %p103, %p104
      %p106 = pneg %p105
      // Predicated region
      $region9: #{tpu_custom_call.1} parent=5 // pred_check
        _
      $region10: #{tpu_custom_call.1} parent=5 // pred_check_branch
        %108 = sbr.rel (%p105) target = $region12
      $region11: #{tpu_custom_call.1} parent=5 // pred_region
        %s109 = ssub.s32 %s17, 1
      $region12: #{tpu_custom_call.1} parent=5 // pred_fallthru
        _
      %p110 = scmp.lt.s32.totalorder %s17, 2
      // Predicated region
      $region13: #{tpu_custom_call.1} parent=5 // pred_check
        %p111 = pneg %p110
      $region14: #{tpu_custom_call.1} parent=5 // pred_check_branch
        %113 = sbr.rel (%p111) target = $region16
      $region15: #{tpu_custom_call.1} parent=5 // pred_region
        // Predicated region
        $region17: #{tpu_custom_call.1} parent=15 // pred_check
          %p114 = pneg %p37
        $region18: #{tpu_custom_call.1} parent=15 // pred_check_branch
          %116 = sbr.rel (%p114) target = $region20
        $region19: #{tpu_custom_call.1} parent=15 // pred_region
          %s117 = sand.u32 %s27, 1
          %s118 = scalar_lea.sflag [#allocation3], %s117
          %s119 = sand.u32 %s27, 1
          %s120 = smul.addr %s119, 8
          %s121 = scalar_lea.vmem [#allocation2], %s120
          %s123 = ssub.s32 128, 128
          %124 = vsyncadd %s118, %s123
          %s125 = smul.addr %s17, 128
          %s126 = scalar_lea.hbm %s0, %s125
          %s128 = sshll.u32 %s121, 4
          %s129 = int_to_ptr.vmem [resolvable:$true] %s128
          %131 = dma.hbm_to_vmem [thread:$0]  %s126, 128, %s129, %s118
        $region20: #{tpu_custom_call.1} parent=15 // pred_fallthru
          _
        // Predicated region
        $region21: #{tpu_custom_call.1} parent=15 // pred_check
          %p132 = pneg %p63
        $region22: #{tpu_custom_call.1} parent=15 // pred_check_branch
          %134 = sbr.rel (%p132) target = $region24
        $region23: #{tpu_custom_call.1} parent=15 // pred_region
          %s135 = sand.u32 %s53, 1
          %s136 = scalar_lea.sflag [#allocation6], %s135
          %s137 = sand.u32 %s53, 1
          %s138 = smul.addr %s137, 8
          %s139 = scalar_lea.vmem [#allocation5], %s138
          %s141 = ssub.s32 128, 128
          %142 = vsyncadd %s136, %s141
          %s143 = smul.addr %s17, 128
          %s144 = scalar_lea.hbm %s1, %s143
          %s146 = sshll.u32 %s139, 4
          %s147 = int_to_ptr.vmem [resolvable:$true] %s146
          %149 = dma.hbm_to_vmem [thread:$0]  %s144, 128, %s147, %s136
        $region24: #{tpu_custom_call.1} parent=15 // pred_fallthru
          _
      $region16: #{tpu_custom_call.1} parent=5 // pred_fallthru
        _
      %p150 = scmp.le.s32.totalorder 1, %s17
      %p151 = scmp.lt.s32.totalorder %s17, 3
      %p152 = pnand %p150, %p151
      %p153 = pneg %p152
      // Predicated region
      $region25: #{tpu_custom_call.1} parent=5 // pred_check
        _
      $region26: #{tpu_custom_call.1} parent=5 // pred_check_branch
        %155 = sbr.rel (%p152) target = $region28
      $region27: #{tpu_custom_call.1} parent=5 // pred_region
        %s156 = ssub.s32 %s17, 1
        %s157 = sand.u32 %s30, 1
        %s158 = scalar_lea.sflag [#allocation3], %s157
        %s159 = sand.u32 %s30, 1
        %s160 = smul.addr %s159, 8
        %s161 = scalar_lea.vmem [#allocation2], %s160
        // Predicated region
        $region29: #{tpu_custom_call.1} parent=27 // pred_check
          %p162 = pneg %p43
        $region30: #{tpu_custom_call.1} parent=27 // pred_check_branch
          %164 = sbr.rel (%p162) target = $region32
        $region31: #{tpu_custom_call.1} parent=27 // pred_region
          %165 = dma.done %s158, 128
        $region32: #{tpu_custom_call.1} parent=27 // pred_fallthru
          _
        %s166 = sand.u32 %s56, 1
        %s167 = scalar_lea.sflag [#allocation6], %s166
        %s168 = sand.u32 %s56, 1
        %s169 = smul.addr %s168, 8
        %s170 = scalar_lea.vmem [#allocation5], %s169
        // Predicated region
        $region33: #{tpu_custom_call.1} parent=27 // pred_check
          %p171 = pneg %p69
        $region34: #{tpu_custom_call.1} parent=27 // pred_check_branch
          %173 = sbr.rel (%p171) target = $region36
        $region35: #{tpu_custom_call.1} parent=27 // pred_region
          %174 = dma.done %s167, 128
        $region36: #{tpu_custom_call.1} parent=27 // pred_fallthru
          _
        %s175 = sand.u32 %s30, 1
        %s176 = scalar_lea.sflag [#allocation3], %s175
        %s177 = sand.u32 %s30, 1
        %s178 = smul.addr %s177, 8
        %s179 = scalar_lea.vmem [#allocation2], %s178
        %p180 = pneg %p43
        %p181 = pneg %p40
        %s182 = sand.u32 %s56, 1
        %s183 = scalar_lea.sflag [#allocation6], %s182
        %s184 = sand.u32 %s56, 1
        %s185 = smul.addr %s184, 8
        %s186 = scalar_lea.vmem [#allocation5], %s185
        %p187 = pneg %p69
        %p188 = pneg %p66
        %p189 = pneg %p95
        %p190 = pneg %p92
        %s191 = sand.u32 %s82, 1
        %s192 = scalar_lea.sflag [#allocation4], %s191
        %s193 = sand.u32 %s82, 1
        %s194 = smul.addr %s193, 8
        %s195 = scalar_lea.vmem [#allocation7], %s194
        %v196 = vld [vmem:[%s161] sm:$0xff]
        %v197 = vld [vmem:[%s170] sm:$0xff]
        %vm198 = vcmask 261120
        %v199 = vsel %vm198, %v197, 0.0
        %200 = vadd.xlane.f32.xlu0 %v199
        %v201 = vpop.xlane.xlu0 %200
        %v202 = vrcp.pop 32.0
        %v203 = vmul.f32 %v201, %v202
        %v204 = vsub.f32 %v197, %v203
        %v205 = vmul.f32 %v204, %v204
        %v206 = vsel %vm198, %v205, 0.0
        %207 = vadd.xlane.f32.xlu0 %v206
        %v208 = vpop.xlane.xlu0 %207
        %v209 = vmul.f32 %v208, %v202
        %v210 = vadd.f32 %v209, 1e-05
        %v211 = vrsqrt.pop %v210
        %v212 = vmul.f32 %v204, %v211
        %v213 = vadd.f32 %v196, %v212
        %214 = vst.msk [vmem:[%s195] sm:$0xff] %vm198, %v213
        %s215 = sand.u32 %s82, 1
        %s216 = scalar_lea.sflag [#allocation4], %s215
        %s217 = sand.u32 %s82, 1
        %s218 = smul.addr %s217, 8
        %s219 = scalar_lea.vmem [#allocation7], %s218
        // Predicated region
        $region37: #{tpu_custom_call.1} parent=27 // pred_check
          %p220 = pneg %p92
        $region38: #{tpu_custom_call.1} parent=27 // pred_check_branch
          %222 = sbr.rel (%p220) target = $region40
        $region39: #{tpu_custom_call.1} parent=27 // pred_region
          %s224 = ssub.s32 128, 128
          %225 = vsyncadd %s216, %s224
          %s226 = smul.addr %s22, 128
          %s227 = scalar_lea.hbm %s2, %s226
          %s229 = sshll.u32 %s219, 4
          %s230 = int_to_ptr.vmem [resolvable:$true] %s229
          %232 = dma.vmem_to_hbm [thread:$0]  %s230, 128, %s227, %s216
        $region40: #{tpu_custom_call.1} parent=27 // pred_fallthru
          _
      $region28: #{tpu_custom_call.1} parent=5 // pred_fallthru
        _
      %p233 = scmp.le.s32.totalorder 2, %s17
      // Predicated region
      $region41: #{tpu_custom_call.1} parent=5 // pred_check
        %p234 = pneg %p233
      $region42: #{tpu_custom_call.1} parent=5 // pred_check_branch
        %236 = sbr.rel (%p234) target = $region44
      $region43: #{tpu_custom_call.1} parent=5 // pred_region
        %s237 = ssub.s32 %s17, 2
        // Predicated region
        $region45: #{tpu_custom_call.1} parent=43 // pred_check
          %p238 = pneg %p98
        $region46: #{tpu_custom_call.1} parent=43 // pred_check_branch
          %240 = sbr.rel (%p238) target = $region48
        $region47: #{tpu_custom_call.1} parent=43 // pred_region
          %s241 = sand.u32 %s83, 1
          %s242 = scalar_lea.sflag [#allocation4], %s241
          %s243 = sand.u32 %s83, 1
          %s244 = smul.addr %s243, 8
          %s245 = scalar_lea.vmem [#allocation7], %s244
          %246 = dma.done %s242, 128
        $region48: #{tpu_custom_call.1} parent=43 // pred_fallthru
          _
      $region44: #{tpu_custom_call.1} parent=5 // pred_fallthru
        _
    $region6: #{tpu_custom_call.1} parent=1 // loop_footer
      %s21 = sadd.s32 1, %s17
    $region7: #{tpu_custom_call.1} parent=1 // loop_footer_branch
      %16 = sbr.rel target = $region3
    $region8: #{tpu_custom_call.1} parent=1 // loop_exit
      _
    %247 = vsyncpa [#allocation3], 1
    %s248 = scalar_lea.sflag [#allocation3], 1
    %249 = vsyncpa %s248, 1
    %250 = vsyncpa [#allocation6], 1
    %s251 = scalar_lea.sflag [#allocation6], 1
    %252 = vsyncpa %s251, 1
    %253 = vsyncpa [#allocation4], 1
    %s254 = scalar_lea.sflag [#allocation4], 1
    %255 = vsyncpa %s254, 1

</llo_original>
